<compile_context>
chip_gen: v7x
topology: tpu7x:2x2x1
jax: 0.10.0
libtpu: 0.0.40
codegen_flags: <defaults>
</compile_context>

<pallas_src>
import functools

import numpy as np
import jax
import jax.numpy as jnp
from jax import lax
from jax.experimental import pallas as pl
from jax.experimental.pallas import tpu as pltpu


# --------------------------------------------------------------------------
# Linear(temporal_len -> 256) + LeakyReLU(0.2), fused in one kernel.
# --------------------------------------------------------------------------
def _linear_lrelu_kernel(x_ref, w_ref, b_ref, o_ref, *, slope):
    y = jnp.dot(x_ref[...], w_ref[...], preferred_element_type=jnp.float32)
    y = y + b_ref[...]
    o_ref[...] = jnp.where(y > 0, y, slope * y)


def linear_lrelu(x, w, b, *, slope=0.2):
    B, K = x.shape
    _, N = w.shape
    return pl.pallas_call(
        functools.partial(_linear_lrelu_kernel, slope=slope),
        out_shape=jax.ShapeDtypeStruct((B, N), jnp.float32),
        grid=(1,),
        in_specs=[
            pl.BlockSpec((B, K), lambda i: (0, 0)),
            pl.BlockSpec((K, N), lambda i: (0, 0)),
            pl.BlockSpec((1, N), lambda i: (0, 0)),
        ],
        out_specs=pl.BlockSpec((B, N), lambda i: (0, 0)),
        compiler_params=pltpu.CompilerParams(
            dimension_semantics=("arbitrary",)),
    )(x, w, b.reshape(1, N))


# --------------------------------------------------------------------------
# 3x3 conv (padding=1) + bias + activation, NHWC, one row-tile per grid step.
# --------------------------------------------------------------------------
def _conv3x3_act_kernel(xp_ref, w_ref, b_ref, o_ref, *,
                        th, w_out, cin, cout, act, slope):
    # xp_ref: (1, H+2, W+2, Cin)  zero-padded (upsampled) input, full slab.
    # w_ref : (9, Cin, Cout)      taps ordered (dy, dx) row-major.
    # b_ref : (1, Cout)
    # o_ref : (1, TH, W, Cout)    current output row tile.
    r = pl.program_id(1)
    row0 = pl.multiple_of(r * th, th)

    acc = jnp.zeros((th * w_out, cout), dtype=jnp.float32)
    for t in range(9):
        dy, dx = t // 3, t % 3
        # Rows are a leading dim (cheap dynamic slice); dx shifts the sublane
        # axis by 0/1/2; channels stay on the lane axis.
        xs = xp_ref[0, pl.ds(row0 + dy, th), pl.ds(dx, w_out), :]  # (TH, W, Cin)
        xs = xs.reshape(th * w_out, cin)                           # free reshape
        if cin == 1:
            # K=1 "matmul" is just a lane broadcast-multiply on the VPU.
            acc = acc + xs * w_ref[t]
        else:
            acc = acc + jnp.dot(xs, w_ref[t],
                                preferred_element_type=jnp.float32)

    y = acc + b_ref[...]
    if act == "leaky":
        y = jnp.where(y > 0, y, slope * y)
    else:  # "tanh"
        y = jnp.tanh(y)
    o_ref[0] = y.reshape(th, w_out, cout)


def conv3x3_act(x_nhwc, w_hwio, bias, *, act, slope=0.2, upsample=False):
    """x_nhwc: (B, H, W, Cin); w_hwio: (3, 3, Cin, Cout); bias: (Cout,)."""
    if upsample:  # nearest, scale_factor=2  (data movement only)
        x_nhwc = jnp.repeat(jnp.repeat(x_nhwc, 2, axis=1), 2, axis=2)
    B, H, W, Cin = x_nhwc.shape
    Cout = w_hwio.shape[-1]

    xp = jnp.pad(x_nhwc, ((0, 0), (1, 1), (1, 1), (0, 0)))     # zero pad=1
    w_taps = w_hwio.reshape(9, Cin, Cout)
    b2 = bias.reshape(1, Cout)

    # Row tile: keep the matmul M dim ~1-2K and temporaries small.
    th = max(8, min(H, 2048 // W))
    while H % th:
        th //= 2
    n_rt = H // th

    kern = functools.partial(_conv3x3_act_kernel, th=th, w_out=W,
                             cin=Cin, cout=Cout, act=act, slope=slope)
    return pl.pallas_call(
        kern,
        out_shape=jax.ShapeDtypeStruct((B, H, W, Cout), jnp.float32),
        grid=(B, n_rt),
        in_specs=[
            # Full padded slab per batch element; constant across row tiles,
            # so it is DMA'd once per batch element and stays VMEM-resident.
            pl.BlockSpec((1, H + 2, W + 2, Cin), lambda bi, r: (bi, 0, 0, 0)),
            pl.BlockSpec((9, Cin, Cout), lambda bi, r: (0, 0, 0)),
            pl.BlockSpec((1, Cout), lambda bi, r: (0, 0)),
        ],
        out_specs=pl.BlockSpec((1, th, W, Cout), lambda bi, r: (bi, r, 0, 0)),
        compiler_params=pltpu.CompilerParams(
            dimension_semantics=("parallel", "parallel"),
            vmem_limit_bytes=48 * 1024 * 1024),
    )(xp, w_taps, b2)


# --------------------------------------------------------------------------
# Full TSGAN_G forward.
# --------------------------------------------------------------------------
def tsgan_g_forward(x, wl, bl, convs):
    y = linear_lrelu(x, wl, bl)            # (B, 256)
    y = y.reshape(-1, 16, 16, 1)           # == torch .view(-1, 1, 16, 16), NHWC
    acts = ("leaky", "leaky", "leaky", "tanh")
    for (w, b, up), act in zip(convs, acts):
        y = conv3x3_act(y, w, b, act=act, upsample=up)
    return jnp.transpose(y, (0, 3, 1, 2))  # NCHW (B, 1, 128, 128), like torch


# --------------------------------------------------------------------------
# Pure-JAX reference (same math, XLA conv) for validation.
# --------------------------------------------------------------------------
def _reference(x, wl, bl, convs):
    y = x @ wl + bl
    y = jnp.where(y > 0, y, 0.2 * y)
    y = y.reshape(-1, 16, 16, 1)
    for i, (w, b, up) in enumerate(convs):
        if up:
            y = jnp.repeat(jnp.repeat(y, 2, axis=1), 2, axis=2)
        y = lax.conv_general_dilated(
            y, w, window_strides=(1, 1), padding=((1, 1), (1, 1)),
            dimension_numbers=("NHWC", "HWIO", "NHWC"))
        y = y + b
        y = jnp.where(y > 0, y, 0.2 * y) if i < 3 else jnp.tanh(y)
    return jnp.transpose(y, (0, 3, 1, 2))


if __name__ == "__main__":
    key = jax.random.PRNGKey(0)
    temporal_len = 1016
    B = 2
    keys = jax.random.split(key, 12)

    x = jax.random.normal(keys[0], (B, temporal_len), dtype=jnp.float32)

    def winit(k, shape, scale):
        return scale * jax.random.normal(k, shape, dtype=jnp.float32)

    # Linear(1016 -> 256) parameters (stored as (in, out)).
    wl = winit(keys[1], (temporal_len, 256), 1.0 / np.sqrt(temporal_len))
    bl = winit(keys[2], (256,), 0.01)

    # Conv stack: (Cin, Cout, upsample_before)
    conv_defs = [(1, 32, True), (32, 64, True), (64, 128, True), (128, 1, False)]
    convs = []
    for i, (cin, cout, up) in enumerate(conv_defs):
        w = winit(keys[3 + 2 * i], (3, 3, cin, cout), 1.0 / np.sqrt(9 * cin))
        b = winit(keys[4 + 2 * i], (cout,), 0.01)
        convs.append((w, b, up))

    out = tsgan_g_forward(x, wl, bl, convs)
    out = jax.block_until_ready(out)
    assert out.shape == (B, 1, 128, 128)

    ref = _reference(x, wl, bl, convs)
    np.testing.assert_allclose(np.asarray(out), np.asarray(ref),
                               rtol=2e-3, atol=2e-3)
    print("KERNEL_OK")
</pallas_src>

<mosaic_0001>
module attributes {stable_mosaic.version = 11 : i64} {
  func.func @_linear_lrelu_kernel(%arg0: i32, %arg1: memref<2x1016xf32, #tpu.memory_space<vmem>>, %arg2: memref<1016x256xf32, #tpu.memory_space<vmem>>, %arg3: memref<1x256xf32, #tpu.memory_space<vmem>>, %arg4: memref<2x256xf32, #tpu.memory_space<vmem>>) attributes {dimension_semantics = [#tpu.dimension_semantics<arbitrary>], iteration_bounds = array<i64: 1>, scalar_prefetch = 0 : i64, scratch_operands = 0 : i64, tpu.core_type = #tpu.core_type<tc>, window_params = [{pipeline_mode = #tpu.pipeline_mode<synchronous>, transform_indices = @transform_0, window_bounds = array<i64: 2, 1016>}, {pipeline_mode = #tpu.pipeline_mode<synchronous>, transform_indices = @transform_1, window_bounds = array<i64: 1016, 256>}, {pipeline_mode = #tpu.pipeline_mode<synchronous>, transform_indices = @transform_2, window_bounds = array<i64: 1, 256>}, {pipeline_mode = #tpu.pipeline_mode<synchronous>, transform_indices = @transform_3, window_bounds = array<i64: 2, 256>}]} {
    %c0 = arith.constant 0 : index
    %c0_0 = arith.constant 0 : index
    %0 = vector.load %arg1[%c0, %c0_0] : memref<2x1016xf32, #tpu.memory_space<vmem>>, vector<2x1016xf32>
    %c0_1 = arith.constant 0 : index
    %c0_2 = arith.constant 0 : index
    %1 = vector.load %arg2[%c0_1, %c0_2] : memref<1016x256xf32, #tpu.memory_space<vmem>>, vector<1016x256xf32>
    %cst = arith.constant dense<0.000000e+00> : vector<2x256xf32>
    %2 = tpu.matmul %0, %1, %cst {dimension_numbers = #tpu.dot_dimension_numbers<[1], [0], [0], [1], [0, 0, 1, 1], [], []>} : vector<2x1016xf32>, vector<1016x256xf32>, vector<2x256xf32> -> vector<2x256xf32>
    %c0_3 = arith.constant 0 : index
    %c0_4 = arith.constant 0 : index
    %3 = vector.load %arg3[%c0_3, %c0_4] : memref<1x256xf32, #tpu.memory_space<vmem>>, vector<1x256xf32>
    %4 = vector.broadcast %3 : vector<1x256xf32> to vector<2x256xf32>
    %5 = arith.addf %2, %4 : vector<2x256xf32>
    %cst_5 = arith.constant 0.000000e+00 : f32
    %6 = vector.broadcast %cst_5 : f32 to vector<2x256xf32>
    %7 = arith.cmpf ogt, %5, %6 : vector<2x256xf32>
    %cst_6 = arith.constant 2.000000e-01 : f32
    %8 = vector.broadcast %cst_6 : f32 to vector<2x256xf32>
    %9 = arith.mulf %8, %5 : vector<2x256xf32>
    %10 = arith.select %7, %5, %9 : vector<2x256xi1>, vector<2x256xf32>
    %c0_7 = arith.constant 0 : index
    %c0_8 = arith.constant 0 : index
    %11 = vector.load %arg4[%c0_7, %c0_8] : memref<2x256xf32, #tpu.memory_space<vmem>>, vector<2x256xf32>
    tpu.vector_store %arg4[%c0_7, %c0_8], %10 {strides = array<i32>} : memref<2x256xf32, #tpu.memory_space<vmem>>, vector<2x256xf32>,
    return
  }
  func.func @transform_0(%arg0: i32) -> (i32, i32) {
    %c0_i32 = arith.constant 0 : i32
    %c0_i32_0 = arith.constant 0 : i32
    %c0_i32_1 = arith.constant 0 : i32
    return %c0_i32, %c0_i32_0 : i32, i32
  }
  func.func @transform_1(%arg0: i32) -> (i32, i32) {
    %c0_i32 = arith.constant 0 : i32
    %c0_i32_0 = arith.constant 0 : i32
    %c0_i32_1 = arith.constant 0 : i32
    return %c0_i32, %c0_i32_0 : i32, i32
  }
  func.func @transform_2(%arg0: i32) -> (i32, i32) {
    %c0_i32 = arith.constant 0 : i32
    %c0_i32_0 = arith.constant 0 : i32
    %c0_i32_1 = arith.constant 0 : i32
    return %c0_i32, %c0_i32_0 : i32, i32
  }
  func.func @transform_3(%arg0: i32) -> (i32, i32) {
    %c0_i32 = arith.constant 0 : i32
    %c0_i32_0 = arith.constant 0 : i32
    %c0_i32_1 = arith.constant 0 : i32
    return %c0_i32, %c0_i32_0 : i32, i32
  }
}

</mosaic_0001>

<llo_original>
// kernel: tpu_custom_call.1
$region0: #{tpu_custom_call.1}
  #allocation0 [shape = 'u32[]', space=smem, size = 0x4, offset = 0x4, fixed_abs, tag = 'smem constant byte address 0x4 - core index']
  #allocation1 [shape = 'u32[144,128]{1,0:T(1,128)}', space=vmem, size = 0x12000, scoped, tag = 'internal scratch']
  %s0 = inlined_call_operand.hbm [shape: f32[2,1016], index: 0, kind: input, shape index: {}]
  %s1 = inlined_call_operand.hbm [shape: f32[1016,256], index: 1, kind: input, shape index: {}]
  %s2 = inlined_call_operand.vmem [shape: f32[1,256], index: 2, kind: input, shape index: {}]
  %s3 = inlined_call_operand.hbm [shape: f32[2,256], index: 3, kind: output, shape index: {}]
  %s4 = sld [smem:[#allocation0]]
  $region30: #{tpu_custom_call.1} parent=0
    _
  %s6 = ssub.s32 1, %s4
  %s7 = scalar_select 0, %s6, %s4
  $region1: #{tpu_custom_call.1} parent=0
    #allocation2 [shape = 'u8[8192]{0}', space=vmem, size = 0x2000, scoped, tag = 'input window, operand 0, single buffered']
    #allocation3 [shape = 's32[1]{0}', space=sflag, size = 0x4, scoped, tag = 'scoped memory for tpu_custom_call.1']
    #allocation4 [shape = 's32[1]{0}', space=sflag, size = 0x4, scoped, tag = 'scoped memory for tpu_custom_call.1']
    #allocation5 [shape = 'u8[1040384]{0}', space=vmem, size = 0xfe000, scoped, tag = 'input window, operand 1, single buffered']
    #allocation6 [shape = 's32[1]{0}', space=sflag, size = 0x4, scoped, tag = 'scoped memory for tpu_custom_call.1']
    #allocation7 [shape = 'u8[2048]{0}', space=vmem, size = 0x800, scoped, tag = 'output window, operand 0, single buffered']
    %8 = vsyncpa [#allocation3], 0
    %9 = vsyncpa [#allocation6], 0
    %10 = vsyncpa [#allocation4], 0
    // Predicated region
    $region2: #{tpu_custom_call.1} parent=1 // pred_check
      _
    $region3: #{tpu_custom_call.1} parent=1 // pred_check_branch
      %12 = sbr.rel (0) target = $region5
    $region4: #{tpu_custom_call.1} parent=1 // pred_region
      %s14 = ssub.s32 256, 256
      %15 = vsyncadd [#allocation3], %s14
      %s17 = sshll.u32 [#allocation2], 4
      %s18 = int_to_ptr.vmem [resolvable:$true] %s17
      %20 = dma.hbm_to_vmem [thread:$0]  %s0, 256, %s18, [#allocation3]
    $region5: #{tpu_custom_call.1} parent=1 // pred_fallthru
      _
    // Predicated region
    $region6: #{tpu_custom_call.1} parent=1 // pred_check
      _
    $region7: #{tpu_custom_call.1} parent=1 // pred_check_branch
      %22 = sbr.rel (0) target = $region9
    $region8: #{tpu_custom_call.1} parent=1 // pred_region
      %s24 = ssub.s32 32512, 32512
      %25 = vsyncadd [#allocation6], %s24
      %s26 = sshll.u32 [#allocation5], 4
      %s27 = int_to_ptr.vmem [resolvable:$true] %s26
      %32 = dma.hbm_to_vmem [thread:$0]  %s1, 32512, %s27, [#allocation6], 256, 256, 16
    $region9: #{tpu_custom_call.1} parent=1 // pred_fallthru
      _
    // Predicated region
    $region10: #{tpu_custom_call.1} parent=1 // pred_check
      _
    $region11: #{tpu_custom_call.1} parent=1 // pred_check_branch
      %34 = sbr.rel (0) target = $region13
    $region12: #{tpu_custom_call.1} parent=1 // pred_region
      _
    $region13: #{tpu_custom_call.1} parent=1 // pred_fallthru
      _
    // Predicated region
    $region14: #{tpu_custom_call.1} parent=1 // pred_check
      _
    $region15: #{tpu_custom_call.1} parent=1 // pred_check_branch
      %36 = sbr.rel (0) target = $region17
    $region16: #{tpu_custom_call.1} parent=1 // pred_region
      %37 = dma.done [#allocation3], 256
    $region17: #{tpu_custom_call.1} parent=1 // pred_fallthru
      _
    // Predicated region
    $region18: #{tpu_custom_call.1} parent=1 // pred_check
      _
    $region19: #{tpu_custom_call.1} parent=1 // pred_check_branch
      %39 = sbr.rel (0) target = $region21
    $region20: #{tpu_custom_call.1} parent=1 // pred_region
      %40 = dma.done [#allocation6], 32512
    $region21: #{tpu_custom_call.1} parent=1 // pred_fallthru
      _
    %v41 = vld [vmem:[#allocation2] sm:$0xff]
    %v42 = vld [vmem:[#allocation2 + $0x8] sm:$0xff]
    %v43 = vld [vmem:[#allocation5] sm:$0xff]
    %v44 = vld [vmem:[#allocation5 + $0x8] sm:$0xff]
    %v45 = vld [vmem:[#allocation5 + $0x10] sm:$0xff]
    %v46 = vld [vmem:[#allocation5 + $0x18] sm:$0xff]
    %v47 = vld [vmem:[#allocation5 + $0x20] sm:$0xff]
    %v48 = vld [vmem:[#allocation5 + $0x28] sm:$0xff]
    %v49 = vld [vmem:[#allocation5 + $0x30] sm:$0xff]
    %v50 = vld [vmem:[#allocation5 + $0x38] sm:$0xff]
    %v51 = vld [vmem:[#allocation5 + $0x40] sm:$0xff]
    %v52 = vld [vmem:[#allocation5 + $0x48] sm:$0xff]
    %v53 = vld [vmem:[#allocation5 + $0x50] sm:$0xff]
    %v54 = vld [vmem:[#allocation5 + $0x58] sm:$0xff]
    %v55 = vld [vmem:[#allocation5 + $0x60] sm:$0xff]
    %v56 = vld [vmem:[#allocation5 + $0x68] sm:$0xff]
    %v57 = vld [vmem:[#allocation5 + $0x70] sm:$0xff]
    %v58 = vld [vmem:[#allocation5 + $0x78] sm:$0xff]
    %v59 = vld [vmem:[#allocation5 + $0x80] sm:$0xff]
    %v60 = vld [vmem:[#allocation5 + $0x88] sm:$0xff]
    %v61 = vld [vmem:[#allocation5 + $0x90] sm:$0xff]
    %v62 = vld [vmem:[#allocation5 + $0x98] sm:$0xff]
    %v63 = vld [vmem:[#allocation5 + $0xa0] sm:$0xff]
    %v64 = vld [vmem:[#allocation5 + $0xa8] sm:$0xff]
    %v65 = vld [vmem:[#allocation5 + $0xb0] sm:$0xff]
    %v66 = vld [vmem:[#allocation5 + $0xb8] sm:$0xff]
    %v67 = vld [vmem:[#allocation5 + $0xc0] sm:$0xff]
    %v68 = vld [vmem:[#allocation5 + $0xc8] sm:$0xff]
    %v69 = vld [vmem:[#allocation5 + $0xd0] sm:$0xff]
    %v70 = vld [vmem:[#allocation5 + $0xd8] sm:$0xff]
    %v71 = vld [vmem:[#allocation5 + $0xe0] sm:$0xff]
    %v72 = vld [vmem:[#allocation5 + $0xe8] sm:$0xff]
    %v73 = vld [vmem:[#allocation5 + $0xf0] sm:$0xff]
    %v74 = vld [vmem:[#allocation5 + $0xf8] sm:$0xff]
    %v75 = vld [vmem:[#allocation5 + $0x100] sm:$0xff]
    %v76 = vld [vmem:[#allocation5 + $0x108] sm:$0xff]
    %v77 = vld [vmem:[#allocation5 + $0x110] sm:$0xff]
    %v78 = vld [vmem:[#allocation5 + $0x118] sm:$0xff]
    %v79 = vld [vmem:[#allocation5 + $0x120] sm:$0xff]
    %v80 = vld [vmem:[#allocation5 + $0x128] sm:$0xff]
    %v81 = vld [vmem:[#allocation5 + $0x130] sm:$0xff]
    %v82 = vld [vmem:[#allocation5 + $0x138] sm:$0xff]
    %v83 = vld [vmem:[#allocation5 + $0x140] sm:$0xff]
    %v84 = vld [vmem:[#allocation5 + $0x148] sm:$0xff]
    %v85 = vld [vmem:[#allocation5 + $0x150] sm:$0xff]
    %v86 = vld [vmem:[#allocation5 + $0x158] sm:$0xff]
    %v87 = vld [vmem:[#allocation5 + $0x160] sm:$0xff]
    %v88 = vld [vmem:[#allocation5 + $0x168] sm:$0xff]
    %v89 = vld [vmem:[#allocation5 + $0x170] sm:$0xff]
    %v90 = vld [vmem:[#allocation5 + $0x178] sm:$0xff]
    %v91 = vld [vmem:[#allocation5 + $0x180] sm:$0xff]
    %v92 = vld [vmem:[#allocation5 + $0x188] sm:$0xff]
    %v93 = vld [vmem:[#allocation5 + $0x190] sm:$0xff]
    %v94 = vld [vmem:[#allocation5 + $0x198] sm:$0xff]
    %v95 = vld [vmem:[#allocation5 + $0x1a0] sm:$0xff]
    %v96 = vld [vmem:[#allocation5 + $0x1a8] sm:$0xff]
    %v97 = vld [vmem:[#allocation5 + $0x1b0] sm:$0xff]
    %v98 = vld [vmem:[#allocation5 + $0x1b8] sm:$0xff]
    %v99 = vld [vmem:[#allocation5 + $0x1c0] sm:$0xff]
    %v100 = vld [vmem:[#allocation5 + $0x1c8] sm:$0xff]
    %v101 = vld [vmem:[#allocation5 + $0x1d0] sm:$0xff]
    %v102 = vld [vmem:[#allocation5 + $0x1d8] sm:$0xff]
    %v103 = vld [vmem:[#allocation5 + $0x1e0] sm:$0xff]
    %v104 = vld [vmem:[#allocation5 + $0x1e8] sm:$0xff]
    %v105 = vld [vmem:[#allocation5 + $0x1f0] sm:$0xff]
    %v106 = vld [vmem:[#allocation5 + $0x1f8] sm:$0xff]
    %v107 = vld [vmem:[#allocation5 + $0x200] sm:$0xff]
    %v108 = vld [vmem:[#allocation5 + $0x208] sm:$0xff]
    %v109 = vld [vmem:[#allocation5 + $0x210] sm:$0xff]
    %v110 = vld [vmem:[#allocation5 + $0x218] sm:$0xff]
    %v111 = vld [vmem:[#allocation5 + $0x220] sm:$0xff]
    %v112 = vld [vmem:[#allocation5 + $0x228] sm:$0xff]
    %v113 = vld [vmem:[#allocation5 + $0x230] sm:$0xff]
    %v114 = vld [vmem:[#allocation5 + $0x238] sm:$0xff]
    %v115 = vld [vmem:[#allocation5 + $0x240] sm:$0xff]
    %v116 = vld [vmem:[#allocation5 + $0x248] sm:$0xff]
    %v117 = vld [vmem:[#allocation5 + $0x250] sm:$0xff]
    %v118 = vld [vmem:[#allocation5 + $0x258] sm:$0xff]
    %v119 = vld [vmem:[#allocation5 + $0x260] sm:$0xff]
    %v120 = vld [vmem:[#allocation5 + $0x268] sm:$0xff]
    %v121 = vld [vmem:[#allocation5 + $0x270] sm:$0xff]
    %v122 = vld [vmem:[#allocation5 + $0x278] sm:$0xff]
    %v123 = vld [vmem:[#allocation5 + $0x280] sm:$0xff]
    %v124 = vld [vmem:[#allocation5 + $0x288] sm:$0xff]
    %v125 = vld [vmem:[#allocation5 + $0x290] sm:$0xff]
    %v126 = vld [vmem:[#allocation5 + $0x298] sm:$0xff]
    %v127 = vld [vmem:[#allocation5 + $0x2a0] sm:$0xff]
    %v128 = vld [vmem:[#allocation5 + $0x2a8] sm:$0xff]
    %v129 = vld [vmem:[#allocation5 + $0x2b0] sm:$0xff]
    %v130 = vld [vmem:[#allocation5 + $0x2b8] sm:$0xff]
    %v131 = vld [vmem:[#allocation5 + $0x2c0] sm:$0xff]
    %v132 = vld [vmem:[#allocation5 + $0x2c8] sm:$0xff]
    %v133 = vld [vmem:[#allocation5 + $0x2d0] sm:$0xff]
    %v134 = vld [vmem:[#allocation5 + $0x2d8] sm:$0xff]
    %v135 = vld [vmem:[#allocation5 + $0x2e0] sm:$0xff]
    %v136 = vld [vmem:[#allocation5 + $0x2e8] sm:$0xff]
    %v137 = vld [vmem:[#allocation5 + $0x2f0] sm:$0xff]
    %v138 = vld [vmem:[#allocation5 + $0x2f8] sm:$0xff]
    %v139 = vld [vmem:[#allocation5 + $0x300] sm:$0xff]
    %v140 = vld [vmem:[#allocation5 + $0x308] sm:$0xff]
    %v141 = vld [vmem:[#allocation5 + $0x310] sm:$0xff]
    %v142 = vld [vmem:[#allocation5 + $0x318] sm:$0xff]
    %v143 = vld [vmem:[#allocation5 + $0x320] sm:$0xff]
    %v144 = vld [vmem:[#allocation5 + $0x328] sm:$0xff]
    %v145 = vld [vmem:[#allocation5 + $0x330] sm:$0xff]
    %v146 = vld [vmem:[#allocation5 + $0x338] sm:$0xff]
    %v147 = vld [vmem:[#allocation5 + $0x340] sm:$0xff]
    %v148 = vld [vmem:[#allocation5 + $0x348] sm:$0xff]
    %v149 = vld [vmem:[#allocation5 + $0x350] sm:$0xff]
    %v150 = vld [vmem:[#allocation5 + $0x358] sm:$0xff]
    %v151 = vld [vmem:[#allocation5 + $0x360] sm:$0xff]
    %v152 = vld [vmem:[#allocation5 + $0x368] sm:$0xff]
    %v153 = vld [vmem:[#allocation5 + $0x370] sm:$0xff]
    %v154 = vld [vmem:[#allocation5 + $0x378] sm:$0xff]
    %v155 = vld [vmem:[#allocation5 + $0x380] sm:$0xff]
    %v156 = vld [vmem:[#allocation5 + $0x388] sm:$0xff]
    %v157 = vld [vmem:[#allocation5 + $0x390] sm:$0xff]
    %v158 = vld [vmem:[#allocation5 + $0x398] sm:$0xff]
    %v159 = vld [vmem:[#allocation5 + $0x3a0] sm:$0xff]
    %v160 = vld [vmem:[#allocation5 + $0x3a8] sm:$0xff]
    %v161 = vld [vmem:[#allocation5 + $0x3b0] sm:$0xff]
    %v162 = vld [vmem:[#allocation5 + $0x3b8] sm:$0xff]
    %v163 = vld [vmem:[#allocation5 + $0x3c0] sm:$0xff]
    %v164 = vld [vmem:[#allocation5 + $0x3c8] sm:$0xff]
    %v165 = vld [vmem:[#allocation5 + $0x3d0] sm:$0xff]
    %v166 = vld [vmem:[#allocation5 + $0x3d8] sm:$0xff]
    %v167 = vld [vmem:[#allocation5 + $0x3e0] sm:$0xff]
    %v168 = vld [vmem:[#allocation5 + $0x3e8] sm:$0xff]
    %v169 = vld [vmem:[#allocation5 + $0x3f0] sm:$0xff]
    %v170 = vld [vmem:[#allocation5 + $0x3f8] sm:$0xff]
    %v171 = vld [vmem:[#allocation5 + $0x400] sm:$0xff]
    %v172 = vld [vmem:[#allocation5 + $0x408] sm:$0xff]
    %v173 = vld [vmem:[#allocation5 + $0x410] sm:$0xff]
    %v174 = vld [vmem:[#allocation5 + $0x418] sm:$0xff]
    %v175 = vld [vmem:[#allocation5 + $0x420] sm:$0xff]
    %v176 = vld [vmem:[#allocation5 + $0x428] sm:$0xff]
    %v177 = vld [vmem:[#allocation5 + $0x430] sm:$0xff]
    %v178 = vld [vmem:[#allocation5 + $0x438] sm:$0xff]
    %v179 = vld [vmem:[#allocation5 + $0x440] sm:$0xff]
    %v180 = vld [vmem:[#allocation5 + $0x448] sm:$0xff]
    %v181 = vld [vmem:[#allocation5 + $0x450] sm:$0xff]
    %v182 = vld [vmem:[#allocation5 + $0x458] sm:$0xff]
    %v183 = vld [vmem:[#allocation5 + $0x460] sm:$0xff]
    %v184 = vld [vmem:[#allocation5 + $0x468] sm:$0xff]
    %v185 = vld [vmem:[#allocation5 + $0x470] sm:$0xff]
    %v186 = vld [vmem:[#allocation5 + $0x478] sm:$0xff]
    %v187 = vld [vmem:[#allocation5 + $0x480] sm:$0xff]
    %v188 = vld [vmem:[#allocation5 + $0x488] sm:$0xff]
    %v189 = vld [vmem:[#allocation5 + $0x490] sm:$0xff]
    %v190 = vld [vmem:[#allocation5 + $0x498] sm:$0xff]
    %v191 = vld [vmem:[#allocation5 + $0x4a0] sm:$0xff]
    %v192 = vld [vmem:[#allocation5 + $0x4a8] sm:$0xff]
    %v193 = vld [vmem:[#allocation5 + $0x4b0] sm:$0xff]
    %v194 = vld [vmem:[#allocation5 + $0x4b8] sm:$0xff]
    %v195 = vld [vmem:[#allocation5 + $0x4c0] sm:$0xff]
    %v196 = vld [vmem:[#allocation5 + $0x4c8] sm:$0xff]
    %v197 = vld [vmem:[#allocation5 + $0x4d0] sm:$0xff]
    %v198 = vld [vmem:[#allocation5 + $0x4d8] sm:$0xff]
    %v199 = vld [vmem:[#allocation5 + $0x4e0] sm:$0xff]
    %v200 = vld [vmem:[#allocation5 + $0x4e8] sm:$0xff]
    %v201 = vld [vmem:[#allocation5 + $0x4f0] sm:$0xff]
    %v202 = vld [vmem:[#allocation5 + $0x4f8] sm:$0xff]
    %v203 = vld [vmem:[#allocation5 + $0x500] sm:$0xff]
    %v204 = vld [vmem:[#allocation5 + $0x508] sm:$0xff]
    %v205 = vld [vmem:[#allocation5 + $0x510] sm:$0xff]
    %v206 = vld [vmem:[#allocation5 + $0x518] sm:$0xff]
    %v207 = vld [vmem:[#allocation5 + $0x520] sm:$0xff]
    %v208 = vld [vmem:[#allocation5 + $0x528] sm:$0xff]
    %v209 = vld [vmem:[#allocation5 + $0x530] sm:$0xff]
    %v210 = vld [vmem:[#allocation5 + $0x538] sm:$0xff]
    %v211 = vld [vmem:[#allocation5 + $0x540] sm:$0xff]
    %v212 = vld [vmem:[#allocation5 + $0x548] sm:$0xff]
    %v213 = vld [vmem:[#allocation5 + $0x550] sm:$0xff]
    %v214 = vld [vmem:[#allocation5 + $0x558] sm:$0xff]
    %v215 = vld [vmem:[#allocation5 + $0x560] sm:$0xff]
    %v216 = vld [vmem:[#allocation5 + $0x568] sm:$0xff]
    %v217 = vld [vmem:[#allocation5 + $0x570] sm:$0xff]
    %v218 = vld [vmem:[#allocation5 + $0x578] sm:$0xff]
    %v219 = vld [vmem:[#allocation5 + $0x580] sm:$0xff]
    %v220 = vld [vmem:[#allocation5 + $0x588] sm:$0xff]
    %v221 = vld [vmem:[#allocation5 + $0x590] sm:$0xff]
    %v222 = vld [vmem:[#allocation5 + $0x598] sm:$0xff]
    %v223 = vld [vmem:[#allocation5 + $0x5a0] sm:$0xff]
    %v224 = vld [vmem:[#allocation5 + $0x5a8] sm:$0xff]
    %v225 = vld [vmem:[#allocation5 + $0x5b0] sm:$0xff]
    %v226 = vld [vmem:[#allocation5 + $0x5b8] sm:$0xff]
    %v227 = vld [vmem:[#allocation5 + $0x5c0] sm:$0xff]
    %v228 = vld [vmem:[#allocation5 + $0x5c8] sm:$0xff]
    %v229 = vld [vmem:[#allocation5 + $0x5d0] sm:$0xff]
    %v230 = vld [vmem:[#allocation5 + $0x5d8] sm:$0xff]
    %v231 = vld [vmem:[#allocation5 + $0x5e0] sm:$0xff]
    %v232 = vld [vmem:[#allocation5 + $0x5e8] sm:$0xff]
    %v233 = vld [vmem:[#allocation5 + $0x5f0] sm:$0xff]
    %v234 = vld [vmem:[#allocation5 + $0x5f8] sm:$0xff]
    %v235 = vld [vmem:[#allocation5 + $0x600] sm:$0xff]
    %v236 = vld [vmem:[#allocation5 + $0x608] sm:$0xff]
    %v237 = vld [vmem:[#allocation5 + $0x610] sm:$0xff]
    %v238 = vld [vmem:[#allocation5 + $0x618] sm:$0xff]
    %v239 = vld [vmem:[#allocation5 + $0x620] sm:$0xff]
    %v240 = vld [vmem:[#allocation5 + $0x628] sm:$0xff]
    %v241 = vld [vmem:[#allocation5 + $0x630] sm:$0xff]
    %v242 = vld [vmem:[#allocation5 + $0x638] sm:$0xff]
    %v243 = vld [vmem:[#allocation5 + $0x640] sm:$0xff]
    %v244 = vld [vmem:[#allocation5 + $0x648] sm:$0xff]
    %v245 = vld [vmem:[#allocation5 + $0x650] sm:$0xff]
    %v246 = vld [vmem:[#allocation5 + $0x658] sm:$0xff]
    %v247 = vld [vmem:[#allocation5 + $0x660] sm:$0xff]
    %v248 = vld [vmem:[#allocation5 + $0x668] sm:$0xff]
    %v249 = vld [vmem:[#allocation5 + $0x670] sm:$0xff]
    %v250 = vld [vmem:[#allocation5 + $0x678] sm:$0xff]
    %v251 = vld [vmem:[#allocation5 + $0x680] sm:$0xff]
    %v252 = vld [vmem:[#allocation5 + $0x688] sm:$0xff]
    %v253 = vld [vmem:[#allocation5 + $0x690] sm:$0xff]
    %v254 = vld [vmem:[#allocation5 + $0x698] sm:$0xff]
    %v255 = vld [vmem:[#allocation5 + $0x6a0] sm:$0xff]
    %v256 = vld [vmem:[#allocation5 + $0x6a8] sm:$0xff]
    %v257 = vld [vmem:[#allocation5 + $0x6b0] sm:$0xff]
    %v258 = vld [vmem:[#allocation5 + $0x6b8] sm:$0xff]
    %v259 = vld [vmem:[#allocation5 + $0x6c0] sm:$0xff]
    %v260 = vld [vmem:[#allocation5 + $0x6c8] sm:$0xff]
    %v261 = vld [vmem:[#allocation5 + $0x6d0] sm:$0xff]
    %v262 = vld [vmem:[#allocation5 + $0x6d8] sm:$0xff]
    %v263 = vld [vmem:[#allocation5 + $0x6e0] sm:$0xff]
    %v264 = vld [vmem:[#allocation5 + $0x6e8] sm:$0xff]
    %v265 = vld [vmem:[#allocation5 + $0x6f0] sm:$0xff]
    %v266 = vld [vmem:[#allocation5 + $0x6f8] sm:$0xff]
    %v267 = vld [vmem:[#allocation5 + $0x700] sm:$0xff]
    %v268 = vld [vmem:[#allocation5 + $0x708] sm:$0xff]
    %v269 = vld [vmem:[#allocation5 + $0x710] sm:$0xff]
    %v270 = vld [vmem:[#allocation5 + $0x718] sm:$0xff]
    %v271 = vld [vmem:[#allocation5 + $0x720] sm:$0xff]
    %v272 = vld [vmem:[#allocation5 + $0x728] sm:$0xff]
    %v273 = vld [vmem:[#allocation5 + $0x730] sm:$0xff]
    %v274 = vld [vmem:[#allocation5 + $0x738] sm:$0xff]
    %v275 = vld [vmem:[#allocation5 + $0x740] sm:$0xff]
    %v276 = vld [vmem:[#allocation5 + $0x748] sm:$0xff]
    %v277 = vld [vmem:[#allocation5 + $0x750] sm:$0xff]
    %v278 = vld [vmem:[#allocation5 + $0x758] sm:$0xff]
    %v279 = vld [vmem:[#allocation5 + $0x760] sm:$0xff]
    %v280 = vld [vmem:[#allocation5 + $0x768] sm:$0xff]
    %v281 = vld [vmem:[#allocation5 + $0x770] sm:$0xff]
    %v282 = vld [vmem:[#allocation5 + $0x778] sm:$0xff]
    %v283 = vld [vmem:[#allocation5 + $0x780] sm:$0xff]
    %v284 = vld [vmem:[#allocation5 + $0x788] sm:$0xff]
    %v285 = vld [vmem:[#allocation5 + $0x790] sm:$0xff]
    %v286 = vld [vmem:[#allocation5 + $0x798] sm:$0xff]
    %v287 = vld [vmem:[#allocation5 + $0x7a0] sm:$0xff]
    %v288 = vld [vmem:[#allocation5 + $0x7a8] sm:$0xff]
    %v289 = vld [vmem:[#allocation5 + $0x7b0] sm:$0xff]
    %v290 = vld [vmem:[#allocation5 + $0x7b8] sm:$0xff]
    %v291 = vld [vmem:[#allocation5 + $0x7c0] sm:$0xff]
    %v292 = vld [vmem:[#allocation5 + $0x7c8] sm:$0xff]
    %v293 = vld [vmem:[#allocation5 + $0x7d0] sm:$0xff]
    %v294 = vld [vmem:[#allocation5 + $0x7d8] sm:$0xff]
    %v295 = vld [vmem:[#allocation5 + $0x7e0] sm:$0xff]
    %v296 = vld [vmem:[#allocation5 + $0x7e8] sm:$0xff]
    %v297 = vld [vmem:[%s2] sm:$0x3]
    %v299 = vlaneseq
    %v300 = vshrl.u32 %v299, 7
    %v301 = vsub.s32 0, %v300
    %v302 = vrot.slane %v297, %v301
    %v303 = vlaneseq
    %v304 = vshrl.u32 %v303, 7
    %v305 = vsub.s32 1, %v304
    %v306 = vrot.slane %v297, %v305
    %v311 = vcombine.high %v41, %v41
    %v313 = vunpack.c.l.s4 1983009808
    %v314 = vunpack.c.0.s8 %v313
    %v315 = vlaneseq
    %v316 = vshrl.u32 %v315, 7
    %v317 = vsub.s32 %v314, %v316
    %v318 = vrot.slane %v41, %v317
    %v320 = vunpack.c.l.s4 1983009808
    %v321 = vunpack.c.0.s8 %v320
    %v322 = vlaneseq
    %v323 = vshrl.u32 %v322, 7
    %v324 = vsub.s32 %v321, %v323
    %v325 = vrot.slane %v311, %v324
    %v326 = vcombine.high %v318, %v318
    %v327 = vcombine.high %v325, %v325
    %v328 = vcombine.high %v42, %v42
    %v330 = vunpack.c.l.s4 1983009808
    %v331 = vunpack.c.0.s8 %v330
    %v332 = vlaneseq
    %v333 = vshrl.u32 %v332, 7
    %v334 = vsub.s32 %v331, %v333
    %v335 = vrot.slane %v42, %v334
    %v337 = vunpack.c.l.s4 1983009808
    %v338 = vunpack.c.0.s8 %v337
    %v339 = vlaneseq
    %v340 = vshrl.u32 %v339, 7
    %v341 = vsub.s32 %v338, %v340
    %v342 = vrot.slane %v328, %v341
    %v343 = vcombine.high %v335, %v335
    %v344 = vcombine.high %v342, %v342
    %vm352 = vcmask 982016
    %v353 = vsel %vm352, %v344, 0
    %355 = vmatprep.subr.mxu0 %v44
    %356 = vmatpush1.msra.mxu0 %v43
    %357 = vmatprep.subr.mxu0 %v46
    %358 = vmatpush1.msra.mxu0 %v45
    %359 = vmatprep.subr.mxu0 %v48
    %360 = vmatpush1.msra.mxu0 %v47
    %361 = vmatprep.subr.mxu0 %v50
    %362 = vmatpush1.msra.mxu0 %v49
    %363 = vmatprep.subr.mxu0 %v52
    %364 = vmatpush1.msra.mxu0 %v51
    %365 = vmatprep.subr.mxu0 %v54
    %366 = vmatpush1.msra.mxu0 %v53
    %367 = vmatprep.subr.mxu0 %v56
    %368 = vmatpush1.msra.mxu0 %v55
    %369 = vmatprep.subr.mxu0 %v58
    %370 = vmatpush1.msra.mxu0 %v57
    %371 = vmatprep.subr.mxu0 %v60
    %372 = vmatpush1.msra.mxu0 %v59
    %373 = vmatprep.subr.mxu0 %v62
    %374 = vmatpush1.msra.mxu0 %v61
    %375 = vmatprep.subr.mxu0 %v64
    %376 = vmatpush1.msra.mxu0 %v63
    %377 = vmatprep.subr.mxu0 %v66
    %378 = vmatpush1.msra.mxu0 %v65
    %379 = vmatprep.subr.mxu0 %v68
    %380 = vmatpush1.msra.mxu0 %v67
    %381 = vmatprep.subr.mxu0 %v70
    %382 = vmatpush1.msra.mxu0 %v69
    %383 = vmatprep.subr.mxu0 %v72
    %384 = vmatpush1.msra.mxu0 %v71
    %385 = vmatprep.subr.mxu0 %v74
    %386 = vmatpush1.msra.mxu0 %v73
    %387 = vmatprep.subr.mxu0 %v76
    %388 = vmatpush1.msra.mxu0 %v75
    %389 = vmatprep.subr.mxu0 %v78
    %390 = vmatpush1.msra.mxu0 %v77
    %391 = vmatprep.subr.mxu0 %v80
    %392 = vmatpush1.msra.mxu0 %v79
    %393 = vmatprep.subr.mxu0 %v82
    %394 = vmatpush1.msra.mxu0 %v81
    %395 = vmatprep.subr.mxu0 %v84
    %396 = vmatpush1.msra.mxu0 %v83
    %397 = vmatprep.subr.mxu0 %v86
    %398 = vmatpush1.msra.mxu0 %v85
    %399 = vmatprep.subr.mxu0 %v88
    %400 = vmatpush1.msra.mxu0 %v87
    %401 = vmatprep.subr.mxu0 %v90
    %402 = vmatpush1.msra.mxu0 %v89
    %403 = vmatprep.subr.mxu0 %v92
    %404 = vmatpush1.msra.mxu0 %v91
    %405 = vmatprep.subr.mxu0 %v94
    %406 = vmatpush1.msra.mxu0 %v93
    %407 = vmatprep.subr.mxu0 %v96
    %408 = vmatpush1.msra.mxu0 %v95
    %409 = vmatprep.subr.mxu0 %v98
    %410 = vmatpush1.msra.mxu0 %v97
    %411 = vmatprep.subr.mxu0 %v100
    %412 = vmatpush1.msra.mxu0 %v99
    %413 = vmatprep.subr.mxu0 %v102
    %414 = vmatpush1.msra.mxu0 %v101
    %415 = vmatprep.subr.mxu0 %v104
    %416 = vmatpush1.msra.mxu0 %v103
    %417 = vmatprep.subr.mxu0 %v106
    %418 = vmatpush1.msra.mxu0 %v105
    %419 = vmatprep.mubr.f32.mxu0 %v326
    %420 = vmatmul.mubr.f32.gmra.mrb[0].mxu0 %v318
    %v421 = vpop.f32.mrb[0].mxu0
    %v422 = vadd.f32 %v302, %v421
    %v423 = vpop.f32.mrb[0].mxu0
    %v424 = vadd.f32 %v306, %v423
    %425 = vdwg.mxu0
    %426 = vmatprep.subr.mxu0 %v108
    %427 = vmatpush1.msra.mxu0 %v107
    %428 = vmatprep.subr.mxu0 %v110
    %429 = vmatpush1.msra.mxu0 %v109
    %430 = vmatprep.subr.mxu0 %v112
    %431 = vmatpush1.msra.mxu0 %v111
    %432 = vmatprep.subr.mxu0 %v114
    %433 = vmatpush1.msra.mxu0 %v113
    %434 = vmatprep.subr.mxu0 %v116
    %435 = vmatpush1.msra.mxu0 %v115
    %436 = vmatprep.subr.mxu0 %v118
    %437 = vmatpush1.msra.mxu0 %v117
    %438 = vmatprep.subr.mxu0 %v120
    %439 = vmatpush1.msra.mxu0 %v119
    %440 = vmatprep.subr.mxu0 %v122
    %441 = vmatpush1.msra.mxu0 %v121
    %442 = vmatprep.subr.mxu0 %v124
    %443 = vmatpush1.msra.mxu0 %v123
    %444 = vmatprep.subr.mxu0 %v126
    %445 = vmatpush1.msra.mxu0 %v125
    %446 = vmatprep.subr.mxu0 %v128
    %447 = vmatpush1.msra.mxu0 %v127
    %448 = vmatprep.subr.mxu0 %v130
    %449 = vmatpush1.msra.mxu0 %v129
    %450 = vmatprep.subr.mxu0 %v132
    %451 = vmatpush1.msra.mxu0 %v131
    %452 = vmatprep.subr.mxu0 %v134
    %453 = vmatpush1.msra.mxu0 %v133
    %454 = vmatprep.subr.mxu0 %v136
    %455 = vmatpush1.msra.mxu0 %v135
    %456 = vmatprep.subr.mxu0 %v138
    %457 = vmatpush1.msra.mxu0 %v137
    %458 = vmatprep.subr.mxu0 %v140
    %459 = vmatpush1.msra.mxu0 %v139
    %460 = vmatprep.subr.mxu0 %v142
    %461 = vmatpush1.msra.mxu0 %v141
    %462 = vmatprep.subr.mxu0 %v144
    %463 = vmatpush1.msra.mxu0 %v143
    %464 = vmatprep.subr.mxu0 %v146
    %465 = vmatpush1.msra.mxu0 %v145
    %466 = vmatprep.subr.mxu0 %v148
    %467 = vmatpush1.msra.mxu0 %v147
    %468 = vmatprep.subr.mxu0 %v150
    %469 = vmatpush1.msra.mxu0 %v149
    %470 = vmatprep.subr.mxu0 %v152
    %471 = vmatpush1.msra.mxu0 %v151
    %472 = vmatprep.subr.mxu0 %v154
    %473 = vmatpush1.msra.mxu0 %v153
    %474 = vmatprep.subr.mxu0 %v156
    %475 = vmatpush1.msra.mxu0 %v155
    %476 = vmatprep.subr.mxu0 %v158
    %477 = vmatpush1.msra.mxu0 %v157
    %478 = vmatprep.subr.mxu0 %v160
    %479 = vmatpush1.msra.mxu0 %v159
    %480 = vmatprep.subr.mxu0 %v162
    %481 = vmatpush1.msra.mxu0 %v161
    %482 = vmatprep.subr.mxu0 %v164
    %483 = vmatpush1.msra.mxu0 %v163
    %484 = vmatprep.subr.mxu0 %v166
    %485 = vmatpush1.msra.mxu0 %v165
    %486 = vmatprep.subr.mxu0 %v168
    %487 = vmatpush1.msra.mxu0 %v167
    %488 = vmatprep.subr.mxu0 %v170
    %489 = vmatpush1.msra.mxu0 %v169
    %490 = vmatprep.mubr.f32.mxu0 %v327
    %491 = vmatmul.mubr.f32.gmra.mrb[0].mxu0 %v325
    %v492 = vpop.f32.mrb[0].mxu0
    %v493 = vadd.f32 %v422, %v492
    %v494 = vpop.f32.mrb[0].mxu0
    %v495 = vadd.f32 %v424, %v494
    %496 = vdwg.mxu0
    %497 = vmatprep.subr.mxu0 %v172
    %498 = vmatpush1.msra.mxu0 %v171
    %499 = vmatprep.subr.mxu0 %v174
    %500 = vmatpush1.msra.mxu0 %v173
    %501 = vmatprep.subr.mxu0 %v176
    %502 = vmatpush1.msra.mxu0 %v175
    %503 = vmatprep.subr.mxu0 %v178
    %504 = vmatpush1.msra.mxu0 %v177
    %505 = vmatprep.subr.mxu0 %v180
    %506 = vmatpush1.msra.mxu0 %v179
    %507 = vmatprep.subr.mxu0 %v182
    %508 = vmatpush1.msra.mxu0 %v181
    %509 = vmatprep.subr.mxu0 %v184
    %510 = vmatpush1.msra.mxu0 %v183
    %511 = vmatprep.subr.mxu0 %v186
    %512 = vmatpush1.msra.mxu0 %v185
    %513 = vmatprep.subr.mxu0 %v188
    %514 = vmatpush1.msra.mxu0 %v187
    %515 = vmatprep.subr.mxu0 %v190
    %516 = vmatpush1.msra.mxu0 %v189
    %517 = vmatprep.subr.mxu0 %v192
    %518 = vmatpush1.msra.mxu0 %v191
    %519 = vmatprep.subr.mxu0 %v194
    %520 = vmatpush1.msra.mxu0 %v193
    %521 = vmatprep.subr.mxu0 %v196
    %522 = vmatpush1.msra.mxu0 %v195
    %523 = vmatprep.subr.mxu0 %v198
    %524 = vmatpush1.msra.mxu0 %v197
    %525 = vmatprep.subr.mxu0 %v200
    %526 = vmatpush1.msra.mxu0 %v199
    %527 = vmatprep.subr.mxu0 %v202
    %528 = vmatpush1.msra.mxu0 %v201
    %529 = vmatprep.subr.mxu0 %v204
    %530 = vmatpush1.msra.mxu0 %v203
    %531 = vmatprep.subr.mxu0 %v206
    %532 = vmatpush1.msra.mxu0 %v205
    %533 = vmatprep.subr.mxu0 %v208
    %534 = vmatpush1.msra.mxu0 %v207
    %535 = vmatprep.subr.mxu0 %v210
    %536 = vmatpush1.msra.mxu0 %v209
    %537 = vmatprep.subr.mxu0 %v212
    %538 = vmatpush1.msra.mxu0 %v211
    %539 = vmatprep.subr.mxu0 %v214
    %540 = vmatpush1.msra.mxu0 %v213
    %541 = vmatprep.subr.mxu0 %v216
    %542 = vmatpush1.msra.mxu0 %v215
    %543 = vmatprep.subr.mxu0 %v218
    %544 = vmatpush1.msra.mxu0 %v217
    %545 = vmatprep.subr.mxu0 %v220
    %546 = vmatpush1.msra.mxu0 %v219
    %547 = vmatprep.subr.mxu0 %v222
    %548 = vmatpush1.msra.mxu0 %v221
    %549 = vmatprep.subr.mxu0 %v224
    %550 = vmatpush1.msra.mxu0 %v223
    %551 = vmatprep.subr.mxu0 %v226
    %552 = vmatpush1.msra.mxu0 %v225
    %553 = vmatprep.subr.mxu0 %v228
    %554 = vmatpush1.msra.mxu0 %v227
    %555 = vmatprep.subr.mxu0 %v230
    %556 = vmatpush1.msra.mxu0 %v229
    %557 = vmatprep.subr.mxu0 %v232
    %558 = vmatpush1.msra.mxu0 %v231
    %559 = vmatprep.subr.mxu0 %v234
    %560 = vmatpush1.msra.mxu0 %v233
    %561 = vmatprep.mubr.f32.mxu0 %v343
    %562 = vmatmul.mubr.f32.gmra.mrb[0].mxu0 %v335
    %v563 = vpop.f32.mrb[0].mxu0
    %v564 = vadd.f32 %v493, %v563
    %v565 = vpop.f32.mrb[0].mxu0
    %v566 = vadd.f32 %v495, %v565
    %567 = vdwg.mxu0
    %568 = vmatprep.subr.mxu0 %v236
    %569 = vmatpush1.msra.mxu0 %v235
    %570 = vmatprep.subr.mxu0 %v238
    %571 = vmatpush1.msra.mxu0 %v237
    %572 = vmatprep.subr.mxu0 %v240
    %573 = vmatpush1.msra.mxu0 %v239
    %574 = vmatprep.subr.mxu0 %v242
    %575 = vmatpush1.msra.mxu0 %v241
    %576 = vmatprep.subr.mxu0 %v244
    %577 = vmatpush1.msra.mxu0 %v243
    %578 = vmatprep.subr.mxu0 %v246
    %579 = vmatpush1.msra.mxu0 %v245
    %580 = vmatprep.subr.mxu0 %v248
    %581 = vmatpush1.msra.mxu0 %v247
    %582 = vmatprep.subr.mxu0 %v250
    %583 = vmatpush1.msra.mxu0 %v249
    %584 = vmatprep.subr.mxu0 %v252
    %585 = vmatpush1.msra.mxu0 %v251
    %586 = vmatprep.subr.mxu0 %v254
    %587 = vmatpush1.msra.mxu0 %v253
    %588 = vmatprep.subr.mxu0 %v256
    %589 = vmatpush1.msra.mxu0 %v255
    %590 = vmatprep.subr.mxu0 %v258
    %591 = vmatpush1.msra.mxu0 %v257
    %592 = vmatprep.subr.mxu0 %v260
    %593 = vmatpush1.msra.mxu0 %v259
    %594 = vmatprep.subr.mxu0 %v262
    %595 = vmatpush1.msra.mxu0 %v261
    %596 = vmatprep.subr.mxu0 %v264
    %597 = vmatpush1.msra.mxu0 %v263
    %598 = vmatprep.subr.mxu0 %v266
    %599 = vmatpush1.msra.mxu0 %v265
    %600 = vmatprep.subr.mxu0 %v268
    %601 = vmatpush1.msra.mxu0 %v267
    %602 = vmatprep.subr.mxu0 %v270
    %603 = vmatpush1.msra.mxu0 %v269
    %604 = vmatprep.subr.mxu0 %v272
    %605 = vmatpush1.msra.mxu0 %v271
    %606 = vmatprep.subr.mxu0 %v274
    %607 = vmatpush1.msra.mxu0 %v273
    %608 = vmatprep.subr.mxu0 %v276
    %609 = vmatpush1.msra.mxu0 %v275
    %610 = vmatprep.subr.mxu0 %v278
    %611 = vmatpush1.msra.mxu0 %v277
    %612 = vmatprep.subr.mxu0 %v280
    %613 = vmatpush1.msra.mxu0 %v279
    %614 = vmatprep.subr.mxu0 %v282
    %615 = vmatpush1.msra.mxu0 %v281
    %616 = vmatprep.subr.mxu0 %v284
    %617 = vmatpush1.msra.mxu0 %v283
    %618 = vmatprep.subr.mxu0 %v286
    %619 = vmatpush1.msra.mxu0 %v285
    %620 = vmatprep.subr.mxu0 %v288
    %621 = vmatpush1.msra.mxu0 %v287
    %622 = vmatprep.subr.mxu0 %v290
    %623 = vmatpush1.msra.mxu0 %v289
    %624 = vmatprep.subr.mxu0 %v292
    %625 = vmatpush1.msra.mxu0 %v291
    %626 = vmatprep.subr.mxu0 %v294
    %627 = vmatpush1.msra.mxu0 %v293
    %628 = vmatprep.subr.mxu0 %v296
    %629 = vmatpush1.msra.mxu0 %v295
    %630 = vmatprep.subr.mxu0 0.0
    %631 = vmatpush1.msra.mxu0 0.0
    %632 = vmatprep.mubr.f32.mxu0 %v353
    %633 = vmatmul.mubr.f32.gmra.mrb[0].mxu0 %v342
    %v634 = vpop.f32.mrb[0].mxu0
    %v635 = vadd.f32 %v564, %v634
    %v636 = vpop.f32.mrb[0].mxu0
    %v637 = vadd.f32 %v566, %v636
    %638 = vdwg.mxu0
    %vm639 = vcmp.gt.f32.partialorder %v635, 0.0
    %vm640 = vcmp.gt.f32.partialorder %v637, 0.0
    %v641 = vmul.f32 %v635, 0.2
    %v642 = vmul.f32 %v637, 0.2
    %v643 = vsel %vm639, %v635, %v641
    %v644 = vsel %vm640, %v637, %v642
    %v647 = vcombine.low %v643, %v644
    %v649 = vunpack.c.l.s4 1983009808
    %v650 = vunpack.c.0.s8 %v649
    %v651 = vlaneseq
    %v652 = vshrl.u32 %v651, 7
    %v653 = vsub.s32 %v650, %v652
    %v654 = vrot.slane %v647, %v653
    %656 = vst [vmem:[#allocation7] sm:$0xf] %v654
    // Predicated region
    $region22: #{tpu_custom_call.1} parent=1 // pred_check
      _
    $region23: #{tpu_custom_call.1} parent=1 // pred_check_branch
      %658 = sbr.rel (0) target = $region25
    $region24: #{tpu_custom_call.1} parent=1 // pred_region
      %s660 = ssub.s32 64, 64
      %661 = vsyncadd [#allocation4], %s660
      %s663 = sshll.u32 [#allocation7], 4
      %s664 = int_to_ptr.vmem [resolvable:$true] %s663
      %666 = dma.vmem_to_hbm [thread:$0]  %s664, 64, %s3, [#allocation4]
    $region25: #{tpu_custom_call.1} parent=1 // pred_fallthru
      _
    // Predicated region
    $region26: #{tpu_custom_call.1} parent=1 // pred_check
      _
    $region27: #{tpu_custom_call.1} parent=1 // pred_check_branch
      %668 = sbr.rel (0) target = $region29
    $region28: #{tpu_custom_call.1} parent=1 // pred_region
      %669 = dma.done [#allocation4], 64
    $region29: #{tpu_custom_call.1} parent=1 // pred_fallthru
      _
    %670 = vsyncpa [#allocation3], 1
    %671 = vsyncpa [#allocation6], 1
    %672 = vsyncpa [#allocation4], 1

</llo_original>
